<compile_context>
chip_gen: v7x
topology: tpu7x:2x2x1
jax: 0.10.0
libtpu: 0.0.40
codegen_flags: <defaults>
</compile_context>

<pallas_src>
import functools

import jax
import jax.numpy as jnp
from jax.experimental import pallas as pl
from jax.experimental.pallas import tpu as pltpu

_DT = 0.05
_DAMP = 0.95


def _dynamics_kernel(s_ref, u_ref, o_ref):
    # s_ref: (4, TN)  rows = [px, py, vx, vy], batch on lanes
    # u_ref: (2, TN)  rows = [ax, ay]
    s = s_ref[...]
    u = u_ref[...]
    pos = s[0:2, :]
    vel = s[2:4, :]
    new_pos = pos + _DT * vel
    new_vel = _DAMP * vel + _DT * u
    o_ref[...] = jnp.concatenate([new_pos, new_vel], axis=0).astype(o_ref.dtype)


def _round_up(x, m):
    return ((x + m - 1) // m) * m


@functools.partial(jax.jit, static_argnames=("lane_tile",))
def double_integrator_dynamics(state, action, lane_tile=512):
    """state: (N, 4) f32, action: (N, 2) f32 -> (N, 4) f32 (dim=2 dynamics).

    Matches the PyTorch module's batched (N > 1) semantics.
    """
    # TODO(synk): the PyTorch dim=3 branch has an inconsistent B (5 rows for a
    # 6-dim state) and cannot be implemented faithfully; only dim=2 here.
    # TODO(synk): the N==1 case of torch .squeeze() (which also drops the batch
    # dim) is not reproduced; output is always (N, 4).
    N, S = state.shape
    _, U = action.shape
    assert S == 4 and U == 2, "only dim=2 is supported"

    # Pad batch to a lane-dense multiple of 128 and pick the lane tile.
    Np = _round_up(N, 128)
    if Np <= lane_tile:
        tn = Np
    else:
        tn = lane_tile
        Np = _round_up(N, tn)

    # Lane-dense transposed operands (batch on the 128-lane axis).
    state_t = jnp.zeros((S, Np), state.dtype).at[:, :N].set(state.T)
    action_t = jnp.zeros((U, Np), action.dtype).at[:, :N].set(action.T)

    out_t = pl.pallas_call(
        _dynamics_kernel,
        out_shape=jax.ShapeDtypeStruct((S, Np), state.dtype),
        grid=(Np // tn,),
        in_specs=[
            pl.BlockSpec((S, tn), lambda i: (0, i)),
            pl.BlockSpec((U, tn), lambda i: (0, i)),
        ],
        out_specs=pl.BlockSpec((S, tn), lambda i: (0, i)),
        compiler_params=pltpu.CompilerParams(
            dimension_semantics=("parallel",)),
        cost_estimate=pl.CostEstimate(
            flops=6 * Np,
            transcendentals=0,
            bytes_accessed=(S + U + S) * 4 * Np),
    )(state_t, action_t)

    return out_t[:, :N].T


def make_double_integrator_params(dtype=jnp.float32):
    dt = _DT
    A = jnp.array(
        [[1.0, 0.0, dt, 0.0],
         [0.0, 1.0, 0.0, dt],
         [0.0, 0.0, _DAMP, 0.0],
         [0.0, 0.0, 0.0, _DAMP]], dtype=dtype)
    B = jnp.array(
        [[0.0, 0.0],
         [0.0, 0.0],
         [dt, 0.0],
         [0.0, dt]], dtype=dtype)
    return A, B


if __name__ == "__main__":
    key = jax.random.PRNGKey(0)
    k1, k2 = jax.random.split(key)

    # Small demo shapes: batch = 8, dim = 2 -> state (8, 4), action (8, 2).
    N = 8
    state = jax.random.normal(k1, (N, 4), dtype=jnp.float32)
    action = jax.random.normal(k2, (N, 2), dtype=jnp.float32)

    out = jax.block_until_ready(double_integrator_dynamics(state, action))

    A, B = make_double_integrator_params()
    ref = state @ A.T + action @ B.T
    assert out.shape == (N, 4)
    assert jnp.allclose(out, ref, atol=1e-6, rtol=1e-6)

    # Second check: ragged batch that exercises padding and a multi-tile grid.
    k3, k4 = jax.random.split(k1)
    N2 = 1000
    state2 = jax.random.normal(k3, (N2, 4), dtype=jnp.float32)
    action2 = jax.random.normal(k4, (N2, 2), dtype=jnp.float32)
    out2 = jax.block_until_ready(double_integrator_dynamics(state2, action2))
    ref2 = state2 @ A.T + action2 @ B.T
    assert out2.shape == (N2, 4)
    assert jnp.allclose(out2, ref2, atol=1e-6, rtol=1e-6)

    print("KERNEL_OK")
</pallas_src>

<mosaic_0001>
module attributes {stable_mosaic.version = 11 : i64} {
  func.func @_dynamics_kernel(%arg0: i32, %arg1: memref<4x128xf32, #tpu.memory_space<vmem>>, %arg2: memref<2x128xf32, #tpu.memory_space<vmem>>, %arg3: memref<4x128xf32, #tpu.memory_space<vmem>>) attributes {dimension_semantics = [#tpu.dimension_semantics<parallel>], iteration_bounds = array<i64: 1>, scalar_prefetch = 0 : i64, scratch_operands = 0 : i64, tpu.core_type = #tpu.core_type<tc>, window_params = [{transform_indices = @transform_0, window_bounds = array<i64: 4, 128>}, {transform_indices = @transform_1, window_bounds = array<i64: 2, 128>}, {transform_indices = @transform_2, window_bounds = array<i64: 4, 128>}]} {
    %c0 = arith.constant 0 : index
    %c0_0 = arith.constant 0 : index
    %0 = vector.load %arg1[%c0, %c0_0] : memref<4x128xf32, #tpu.memory_space<vmem>>, vector<4x128xf32>
    %c0_1 = arith.constant 0 : index
    %c0_2 = arith.constant 0 : index
    %1 = vector.load %arg2[%c0_1, %c0_2] : memref<2x128xf32, #tpu.memory_space<vmem>>, vector<2x128xf32>
    %2 = vector.extract_strided_slice %0 {offsets = [0, 0], sizes = [2, 128], strides = [1, 1]} : vector<4x128xf32> to vector<2x128xf32>
    %3 = vector.extract_strided_slice %0 {offsets = [2, 0], sizes = [2, 128], strides = [1, 1]} : vector<4x128xf32> to vector<2x128xf32>
    %cst = arith.constant 5.000000e-02 : f32
    %4 = vector.broadcast %cst : f32 to vector<2x128xf32>
    %5 = arith.mulf %4, %3 : vector<2x128xf32>
    %6 = arith.addf %2, %5 : vector<2x128xf32>
    %cst_3 = arith.constant 0.949999988 : f32
    %7 = vector.broadcast %cst_3 : f32 to vector<2x128xf32>
    %8 = arith.mulf %7, %3 : vector<2x128xf32>
    %cst_4 = arith.constant 5.000000e-02 : f32
    %9 = vector.broadcast %cst_4 : f32 to vector<2x128xf32>
    %10 = arith.mulf %9, %1 : vector<2x128xf32>
    %11 = arith.addf %8, %10 : vector<2x128xf32>
    %12 = tpu.concatenate %6, %11 in 0 : vector<2x128xf32>, vector<2x128xf32> -> vector<4x128xf32>
    %c0_5 = arith.constant 0 : index
    %c0_6 = arith.constant 0 : index
    %13 = vector.load %arg3[%c0_5, %c0_6] : memref<4x128xf32, #tpu.memory_space<vmem>>, vector<4x128xf32>
    tpu.vector_store %arg3[%c0_5, %c0_6], %12 {strides = array<i32>} : memref<4x128xf32, #tpu.memory_space<vmem>>, vector<4x128xf32>,
    return
  }
  func.func @transform_0(%arg0: i32) -> (i32, i32) {
    %c0_i32 = arith.constant 0 : i32
    %c0_i32_0 = arith.constant 0 : i32
    return %c0_i32, %arg0 : i32, i32
  }
  func.func @transform_1(%arg0: i32) -> (i32, i32) {
    %c0_i32 = arith.constant 0 : i32
    %c0_i32_0 = arith.constant 0 : i32
    return %c0_i32, %arg0 : i32, i32
  }
  func.func @transform_2(%arg0: i32) -> (i32, i32) {
    %c0_i32 = arith.constant 0 : i32
    %c0_i32_0 = arith.constant 0 : i32
    return %c0_i32, %arg0 : i32, i32
  }
}

</mosaic_0001>

<llo_original>
// kernel: double_integrator_dynamics.1
$region0: #{double_integrator_dynamics.1}
  #allocation0 [shape = 'u32[]', space=smem, size = 0x4, offset = 0x4, fixed_abs, tag = 'smem constant byte address 0x4 - core index']
  #allocation1 [shape = 'u32[144,128]{1,0:T(1,128)}', space=vmem, size = 0x12000, scoped, tag = 'internal scratch']
  %s0 = inlined_call_operand.vmem [shape: f32[4,128], index: 0, kind: input, shape index: {}]
  %s1 = inlined_call_operand.vmem [shape: f32[2,128], index: 1, kind: input, shape index: {}]
  %s2 = inlined_call_operand.vmem [shape: f32[4,128], index: 2, kind: output, shape index: {}]
  %s3 = sld [smem:[#allocation0]]
  $region18: #{double_integrator_dynamics.1} parent=0
    _
  %s5 = ssub.s32 1, %s3
  %s6 = scalar_select 0, %s5, %s3
  // Predicated region
  $region2: #{double_integrator_dynamics.1} parent=0 // pred_check
    _
  $region3: #{double_integrator_dynamics.1} parent=0 // pred_check_branch
    %8 = sbr.rel (0) target = $region5
  $region4: #{double_integrator_dynamics.1} parent=0 // pred_region
    _
  $region5: #{double_integrator_dynamics.1} parent=0 // pred_fallthru
    _
  // Predicated region
  $region6: #{double_integrator_dynamics.1} parent=0 // pred_check
    _
  $region7: #{double_integrator_dynamics.1} parent=0 // pred_check_branch
    %10 = sbr.rel (0) target = $region9
  $region8: #{double_integrator_dynamics.1} parent=0 // pred_region
    _
  $region9: #{double_integrator_dynamics.1} parent=0 // pred_fallthru
    _
  %v11 = vld [vmem:[%s0] sm:$0xf]
  %v12 = vld [vmem:[%s1] sm:$0x3]
  %v13 = vmul.f32 %v11, 0.05
  %v15 = vrot.slane %v13, 2
  %v17 = vadd.f32 %v11, %v15
  %v18 = vmul.f32 %v11, 0.95
  %v19 = vmul.f32 %v12, 0.05
  %v21 = vrot.slane %v19, 6
  %v23 = vadd.f32 %v18, %v21
  %vm24 = vcmask 1041408
  %v25 = vsel %vm24, %v17, %v23
  %26 = vst [vmem:[%s2] sm:$0xf] %v25
  // Predicated region
  $region10: #{double_integrator_dynamics.1} parent=0 // pred_check
    _
  $region11: #{double_integrator_dynamics.1} parent=0 // pred_check_branch
    %28 = sbr.rel (0) target = $region13
  $region12: #{double_integrator_dynamics.1} parent=0 // pred_region
    _
  $region13: #{double_integrator_dynamics.1} parent=0 // pred_fallthru
    _
  // Predicated region
  $region14: #{double_integrator_dynamics.1} parent=0 // pred_check
    _
  $region15: #{double_integrator_dynamics.1} parent=0 // pred_check_branch
    %30 = sbr.rel (0) target = $region17
  $region16: #{double_integrator_dynamics.1} parent=0 // pred_region
    _
  $region17: #{double_integrator_dynamics.1} parent=0 // pred_fallthru
    _

</llo_original>
